<compile_context>
chip_gen: v5e
topology: v5e:2x2
jax: 0.10.0
libtpu: 0.0.40
codegen_flags: <defaults>
</compile_context>

<pallas_src>
import functools

import jax
import jax.numpy as jnp
from jax.experimental import pallas as pl
from jax.experimental.pallas import tpu as pltpu

_LANE = 128
_SUBLANE = 8
# ~1 MiB per f32 buffer -> 4 arrays x 2 pipeline buffers = 8 MiB VMEM total.
_MAX_TILE_ELEMS = 512 * 512


def _second_deriv_kernel(up_ref, u_ref, um_ref, o_ref, *, c, n2c):
    # o = c*(up + um) + (-2c)*u ; c, n2c are trace-time Python-float constants.
    o_ref[...] = c * (up_ref[...] + um_ref[...]) + n2c * u_ref[...]


def _pick_layout(n):
    """Pick (lanes, rows, tile_rows, pad) for a lane-dense 2D view of n elems."""
    # Prefer the widest lane dimension that divides n with rows % 8 == 0
    # (wide, unmasked lane-dense stores; no padding needed).
    for lanes in (2048, 1024, 512, 256, 128):
        if n % lanes != 0:
            continue
        rows = n // lanes
        if rows % _SUBLANE != 0:
            continue
        max_tile_rows = max(
            _SUBLANE, (_MAX_TILE_ELEMS // lanes) // _SUBLANE * _SUBLANE
        )
        tile_rows = min(rows, max_tile_rows)
        while rows % tile_rows != 0:
            tile_rows -= _SUBLANE
        return lanes, rows, tile_rows, 0
    # Ragged fallback: pad the flattened array up to whole (8, 128) tiles.
    tile_elems = _SUBLANE * _LANE
    pad = (-n) % tile_elems
    total = n + pad
    rows = total // _LANE
    max_tile_rows = max(
        _SUBLANE, (_MAX_TILE_ELEMS // _LANE) // _SUBLANE * _SUBLANE
    )
    tile_rows = min(rows, max_tile_rows)
    while rows % tile_rows != 0:
        tile_rows -= _SUBLANE
    return _LANE, rows, tile_rows, pad


@functools.partial(jax.jit, static_argnames=("c", "n2c", "tile_rows", "lanes"))
def _second_deriv_2d(up2d, u2d, um2d, *, c, n2c, tile_rows, lanes):
    rows, _ = u2d.shape
    grid = (rows // tile_rows,)
    spec = pl.BlockSpec((tile_rows, lanes), lambda i: (i, 0))
    kernel = functools.partial(_second_deriv_kernel, c=c, n2c=n2c)
    return pl.pallas_call(
        kernel,
        out_shape=jax.ShapeDtypeStruct(u2d.shape, u2d.dtype),
        grid=grid,
        in_specs=[spec, spec, spec],
        out_specs=spec,
        compiler_params=pltpu.CompilerParams(
            dimension_semantics=("parallel",),
        ),
    )(up2d, u2d, um2d)


class SecondDerivSecondOrder:
    """JAX/Pallas port of physicsnemo SecondDerivSecondOrder (2nd-order d2/dx2)."""

    def __init__(self, var: str, indep_var: str, out_name: str) -> None:
        self.var = var
        self.indep_var = indep_var
        self.out_name = out_name

    def __call__(self, inputs: dict, dx: float) -> dict:
        u_plus = inputs[f"{self.var}>>{self.indep_var}::1"]
        u = inputs[f"{self.var}"]
        u_minus = inputs[f"{self.var}>>{self.indep_var}::-1"]

        orig_shape = u.shape
        n = u.size
        c = 1.0 / dx ** 2
        n2c = -2.0 / dx ** 2

        lanes, rows, tile_rows, pad = _pick_layout(n)

        def flat(x):
            x = jnp.reshape(x, (-1,))
            if pad:
                x = jnp.pad(x, (0, pad))
            return jnp.reshape(x, (rows, lanes))

        out2d = _second_deriv_2d(
            flat(u_plus), flat(u), flat(u_minus),
            c=c, n2c=n2c, tile_rows=tile_rows, lanes=lanes,
        )
        out = jnp.reshape(out2d, (-1,))
        if pad:
            out = out[:n]
        return {self.out_name: jnp.reshape(out, orig_shape)}


if __name__ == "__main__":
    key = jax.random.PRNGKey(0)
    dx = 0.1
    mod = SecondDerivSecondOrder(var="u", indep_var="x", out_name="u__x__x")

    def run_case(shape, subkey):
        k1, k2, k3 = jax.random.split(subkey, 3)
        u = jax.random.normal(k1, shape, dtype=jnp.float32)
        u_plus = jax.random.normal(k2, shape, dtype=jnp.float32)
        u_minus = jax.random.normal(k3, shape, dtype=jnp.float32)
        inputs = {"u": u, "u>>x::1": u_plus, "u>>x::-1": u_minus}
        out = mod(inputs, dx)["u__x__x"]
        jax.block_until_ready(out)
        # Reference: original torch formula (plain JAX). The kernel folds the
        # coefficient (c*(up+um) - 2c*u), so allow a few f32 ulps of slack.
        ref = (1.0 / dx ** 2) * u_plus + (-2.0 / dx ** 2) * u + (1.0 / dx ** 2) * u_minus
        assert out.shape == shape
        assert jnp.allclose(out, ref, rtol=1e-5, atol=1e-5)

    ka, kb = jax.random.split(key)
    # Standard small NCHW field (evenly divisible -> no-pad wide-lane path).
    run_case((2, 4, 16, 16), ka)
    # Ragged shape (exercises the padded fallback path).
    run_case((2, 3, 5, 7), kb)

    print("KERNEL_OK")
</pallas_src>

<mosaic_0001>
module attributes {stable_mosaic.version = 11 : i64} {
  func.func @_second_deriv_kernel(%arg0: i32, %arg1: memref<8x256xf32, #tpu.memory_space<vmem>>, %arg2: memref<8x256xf32, #tpu.memory_space<vmem>>, %arg3: memref<8x256xf32, #tpu.memory_space<vmem>>, %arg4: memref<8x256xf32, #tpu.memory_space<vmem>>) attributes {dimension_semantics = [#tpu.dimension_semantics<parallel>], iteration_bounds = array<i64: 1>, scalar_prefetch = 0 : i64, scratch_operands = 0 : i64, tpu.core_type = #tpu.core_type<tc>, window_params = [{transform_indices = @transform_0, window_bounds = array<i64: 8, 256>}, {transform_indices = @transform_1, window_bounds = array<i64: 8, 256>}, {transform_indices = @transform_2, window_bounds = array<i64: 8, 256>}, {transform_indices = @transform_3, window_bounds = array<i64: 8, 256>}]} {
    %c0 = arith.constant 0 : index
    %c0_0 = arith.constant 0 : index
    %0 = vector.load %arg1[%c0, %c0_0] : memref<8x256xf32, #tpu.memory_space<vmem>>, vector<8x256xf32>
    %c0_1 = arith.constant 0 : index
    %c0_2 = arith.constant 0 : index
    %1 = vector.load %arg3[%c0_1, %c0_2] : memref<8x256xf32, #tpu.memory_space<vmem>>, vector<8x256xf32>
    %2 = arith.addf %0, %1 : vector<8x256xf32>
    %cst = arith.constant 1.000000e+02 : f32
    %3 = vector.broadcast %cst : f32 to vector<8x256xf32>
    %4 = arith.mulf %3, %2 : vector<8x256xf32>
    %c0_3 = arith.constant 0 : index
    %c0_4 = arith.constant 0 : index
    %5 = vector.load %arg2[%c0_3, %c0_4] : memref<8x256xf32, #tpu.memory_space<vmem>>, vector<8x256xf32>
    %cst_5 = arith.constant -2.000000e+02 : f32
    %6 = vector.broadcast %cst_5 : f32 to vector<8x256xf32>
    %7 = arith.mulf %6, %5 : vector<8x256xf32>
    %8 = arith.addf %4, %7 : vector<8x256xf32>
    %c0_6 = arith.constant 0 : index
    %c0_7 = arith.constant 0 : index
    %9 = vector.load %arg4[%c0_6, %c0_7] : memref<8x256xf32, #tpu.memory_space<vmem>>, vector<8x256xf32>
    tpu.vector_store %arg4[%c0_6, %c0_7], %8 {strides = array<i32>} : memref<8x256xf32, #tpu.memory_space<vmem>>, vector<8x256xf32>,
    return
  }
  func.func @transform_0(%arg0: i32) -> (i32, i32) {
    %c0_i32 = arith.constant 0 : i32
    %c0_i32_0 = arith.constant 0 : i32
    return %arg0, %c0_i32 : i32, i32
  }
  func.func @transform_1(%arg0: i32) -> (i32, i32) {
    %c0_i32 = arith.constant 0 : i32
    %c0_i32_0 = arith.constant 0 : i32
    return %arg0, %c0_i32 : i32, i32
  }
  func.func @transform_2(%arg0: i32) -> (i32, i32) {
    %c0_i32 = arith.constant 0 : i32
    %c0_i32_0 = arith.constant 0 : i32
    return %arg0, %c0_i32 : i32, i32
  }
  func.func @transform_3(%arg0: i32) -> (i32, i32) {
    %c0_i32 = arith.constant 0 : i32
    %c0_i32_0 = arith.constant 0 : i32
    return %arg0, %c0_i32 : i32, i32
  }
}

</mosaic_0001>

<llo_original>
// kernel: _second_deriv_2d.1
$region0: #{_second_deriv_2d.1}
  #allocation0 [shape = 'u32[]', space=smem, size = 0x4, offset = 0x4, fixed_abs, tag = 'smem constant byte address 0x4 - core index']
  #allocation1 [shape = 'u32[72,128]{1,0:T(1,128)}', space=vmem, size = 0x9000, scoped, tag = 'internal scratch']
  %s0 = inlined_call_operand.hbm [shape: f32[8,256], index: 0, kind: input, shape index: {}]
  %s1 = inlined_call_operand.hbm [shape: f32[8,256], index: 1, kind: input, shape index: {}]
  %s2 = inlined_call_operand.hbm [shape: f32[8,256], index: 2, kind: input, shape index: {}]
  %s3 = inlined_call_operand.hbm [shape: f32[8,256], index: 3, kind: output, shape index: {}]
  %s4 = sld [smem:[#allocation0]]
  $region34: #{_second_deriv_2d.1} parent=0
    _
  %s6 = ssub.s32 1, %s4
  %s7 = scalar_select 0, %s6, %s4
  $region1: #{_second_deriv_2d.1} parent=0
    #allocation2 [shape = 'u8[8192]{0}', space=vmem, size = 0x2000, scoped, tag = 'input window, operand 0, single buffered']
    #allocation3 [shape = 's32[1]{0}', space=sflag, size = 0x4, scoped, tag = 'scoped memory for _second_deriv_2d.1']
    #allocation4 [shape = 's32[1]{0}', space=sflag, size = 0x4, scoped, tag = 'scoped memory for _second_deriv_2d.1']
    #allocation5 [shape = 'u8[8192]{0}', space=vmem, size = 0x2000, scoped, tag = 'input window, operand 1, single buffered']
    #allocation6 [shape = 's32[1]{0}', space=sflag, size = 0x4, scoped, tag = 'scoped memory for _second_deriv_2d.1']
    #allocation7 [shape = 'u8[8192]{0}', space=vmem, size = 0x2000, scoped, tag = 'input window, operand 2, single buffered']
    #allocation8 [shape = 'u8[8192]{0}', space=vmem, size = 0x2000, scoped, tag = 'output window, operand 0, single buffered']
    %8 = vsyncpa [#allocation3], 0
    %9 = vsyncpa [#allocation6], 0
    %10 = vsyncpa [#allocation4], 0
    // Predicated region
    $region2: #{_second_deriv_2d.1} parent=1 // pred_check
      _
    $region3: #{_second_deriv_2d.1} parent=1 // pred_check_branch
      %12 = sbr.rel (0) target = $region5
    $region4: #{_second_deriv_2d.1} parent=1 // pred_region
      %14 = vsyncadd [#allocation3], 0
      %s16 = sshll.u32 %s0, 4
      %s17 = int_to_ptr.hbm [resolvable:$true] %s16
      %s18 = sshll.u32 [#allocation2], 4
      %s19 = int_to_ptr.vmem [resolvable:$true] %s18
      %21 = dma.hbm_to_vmem [thread:$0]  %s17, 256, %s19, [#allocation3]
    $region5: #{_second_deriv_2d.1} parent=1 // pred_fallthru
      _
    // Predicated region
    $region6: #{_second_deriv_2d.1} parent=1 // pred_check
      _
    $region7: #{_second_deriv_2d.1} parent=1 // pred_check_branch
      %23 = sbr.rel (0) target = $region9
    $region8: #{_second_deriv_2d.1} parent=1 // pred_region
      %25 = vsyncadd [#allocation6], 0
      %s27 = sshll.u32 %s1, 4
      %s28 = int_to_ptr.hbm [resolvable:$true] %s27
      %s29 = sshll.u32 [#allocation5], 4
      %s30 = int_to_ptr.vmem [resolvable:$true] %s29
      %32 = dma.hbm_to_vmem [thread:$0]  %s28, 256, %s30, [#allocation6]
    $region9: #{_second_deriv_2d.1} parent=1 // pred_fallthru
      _
    // Predicated region
    $region10: #{_second_deriv_2d.1} parent=1 // pred_check
      _
    $region11: #{_second_deriv_2d.1} parent=1 // pred_check_branch
      %34 = sbr.rel (0) target = $region13
    $region12: #{_second_deriv_2d.1} parent=1 // pred_region
      %36 = vsyncadd [#allocation6], 0
      %s38 = sshll.u32 %s2, 4
      %s39 = int_to_ptr.hbm [resolvable:$true] %s38
      %s40 = sshll.u32 [#allocation7], 4
      %s41 = int_to_ptr.vmem [resolvable:$true] %s40
      %43 = dma.hbm_to_vmem [thread:$0]  %s39, 256, %s41, [#allocation6]
    $region13: #{_second_deriv_2d.1} parent=1 // pred_fallthru
      _
    // Predicated region
    $region14: #{_second_deriv_2d.1} parent=1 // pred_check
      _
    $region15: #{_second_deriv_2d.1} parent=1 // pred_check_branch
      %45 = sbr.rel (0) target = $region17
    $region16: #{_second_deriv_2d.1} parent=1 // pred_region
      %47 = dma.done [#allocation3], 256
    $region17: #{_second_deriv_2d.1} parent=1 // pred_fallthru
      _
    // Predicated region
    $region18: #{_second_deriv_2d.1} parent=1 // pred_check
      _
    $region19: #{_second_deriv_2d.1} parent=1 // pred_check_branch
      %49 = sbr.rel (0) target = $region21
    $region20: #{_second_deriv_2d.1} parent=1 // pred_region
      %51 = dma.done [#allocation6], 256
    $region21: #{_second_deriv_2d.1} parent=1 // pred_fallthru
      _
    // Predicated region
    $region22: #{_second_deriv_2d.1} parent=1 // pred_check
      _
    $region23: #{_second_deriv_2d.1} parent=1 // pred_check_branch
      %53 = sbr.rel (0) target = $region25
    $region24: #{_second_deriv_2d.1} parent=1 // pred_region
      %55 = dma.done [#allocation6], 256
    $region25: #{_second_deriv_2d.1} parent=1 // pred_fallthru
      _
    %v56 = vld [vmem:[#allocation2] sm:$0xff]
    %v57 = vld [vmem:[#allocation2 + $0x8] sm:$0xff]
    %v58 = vld [vmem:[#allocation7] sm:$0xff]
    %v59 = vld [vmem:[#allocation7 + $0x8] sm:$0xff]
    %v60 = vadd.f32 %v56, %v58
    %v61 = vadd.f32 %v57, %v59
    %v62 = vmul.f32 %v60, 100.0
    %v63 = vmul.f32 %v61, 100.0
    %v64 = vld [vmem:[#allocation5] sm:$0xff]
    %v65 = vld [vmem:[#allocation5 + $0x8] sm:$0xff]
    %v66 = vmul.f32 %v64, -200.0
    %v67 = vmul.f32 %v65, -200.0
    %v68 = vadd.f32 %v62, %v66
    %v69 = vadd.f32 %v63, %v67
    %70 = vst [vmem:[#allocation8] sm:$0xff] %v68
    %71 = vst [vmem:[#allocation8 + $0x8] sm:$0xff] %v69
    // Predicated region
    $region26: #{_second_deriv_2d.1} parent=1 // pred_check
      _
    $region27: #{_second_deriv_2d.1} parent=1 // pred_check_branch
      %73 = sbr.rel (0) target = $region29
    $region28: #{_second_deriv_2d.1} parent=1 // pred_region
      %75 = vsyncadd [#allocation4], 0
      %s77 = sshll.u32 [#allocation8], 4
      %s78 = int_to_ptr.vmem [resolvable:$true] %s77
      %s79 = sshll.u32 %s3, 4
      %s80 = int_to_ptr.hbm [resolvable:$true] %s79
      %82 = dma.vmem_to_hbm [thread:$0]  %s78, 256, %s80, [#allocation4]
    $region29: #{_second_deriv_2d.1} parent=1 // pred_fallthru
      _
    // Predicated region
    $region30: #{_second_deriv_2d.1} parent=1 // pred_check
      _
    $region31: #{_second_deriv_2d.1} parent=1 // pred_check_branch
      %84 = sbr.rel (0) target = $region33
    $region32: #{_second_deriv_2d.1} parent=1 // pred_region
      %86 = dma.done [#allocation4], 256
    $region33: #{_second_deriv_2d.1} parent=1 // pred_fallthru
      _
    %87 = vsyncpa [#allocation3], 1
    %88 = vsyncpa [#allocation6], 1
    %89 = vsyncpa [#allocation4], 1

</llo_original>
